<compile_context>
chip_gen: v7x
topology: tpu7x:2x2x1
jax: 0.10.0
libtpu: 0.0.40
codegen_flags: <defaults>
</compile_context>

<pallas_src>
import jax
import jax.numpy as jnp
from jax.experimental import pallas as pl
from jax.experimental.pallas import tpu as pltpu

# Below this size the per-grid-step overhead (~0.35 us) + HBM<->VMEM DMAs of a
# pallas_call dominate; pure-XLA elementwise add is the right choice.
_PALLAS_MIN_ELEMENTS = 64 * 1024
_LANES = 1024          # lane-dense last dim (multiple of 128, past the ~512 knee)
_BLOCK_ROWS = 256      # sublane-aligned (multiple of 8); 256x1024 f32 = 1 MiB/block


def _add_one_kernel(x_ref, o_ref):
    # Hot path: elementwise add of 1 on a full lane-dense tile (VPU, unmasked vst).
    o_ref[...] = x_ref[...] + jnp.asarray(1, dtype=o_ref.dtype)


def _add_one_pallas(x):
    """Tiled Pallas elementwise +1 for large tensors of any shape."""
    orig_shape = x.shape
    n = x.size
    block_elems = _BLOCK_ROWS * _LANES

    flat = jnp.reshape(x, (-1,))
    n_padded = pl.cdiv(n, block_elems) * block_elems
    if n_padded != n:
        flat = jnp.pad(flat, (0, n_padded - n))
    x2d = jnp.reshape(flat, (n_padded // _LANES, _LANES))

    out2d = pl.pallas_call(
        _add_one_kernel,
        out_shape=jax.ShapeDtypeStruct(x2d.shape, x2d.dtype),
        grid=(x2d.shape[0] // _BLOCK_ROWS,),
        in_specs=[pl.BlockSpec((_BLOCK_ROWS, _LANES), lambda i: (i, 0))],
        out_specs=pl.BlockSpec((_BLOCK_ROWS, _LANES), lambda i: (i, 0)),
        compiler_params=pltpu.CompilerParams(
            dimension_semantics=("parallel",)),
    )(x2d)

    return jnp.reshape(jnp.reshape(out2d, (-1,))[:n], orig_shape)


def hdy_forward(x):
    """Equivalent of Hdy.forward: returns x + 1 with identical shape/dtype."""
    if x.size < _PALLAS_MIN_ELEMENTS:
        # Scalar / tiny input (the module's actual use case): plain JAX add.
        # A pallas_call here would be pure dispatch + DMA overhead.
        return x + jnp.asarray(1, dtype=x.dtype)
    return _add_one_pallas(x)


if __name__ == "__main__":
    # 1) Module-spec input: 0-d scalar, x = torch.tensor(1.0).
    x_scalar = jnp.asarray(1.0, dtype=jnp.float32)
    out_scalar = hdy_forward(x_scalar)
    jax.block_until_ready(out_scalar)
    assert out_scalar.shape == x_scalar.shape, (out_scalar.shape, x_scalar.shape)
    assert out_scalar.dtype == jnp.float32
    assert jnp.allclose(out_scalar, 2.0), out_scalar

    # 2) Larger deterministic input to exercise the tiled Pallas path.
    key = jax.random.PRNGKey(0)
    x_big = jax.random.normal(key, (512, 1024), dtype=jnp.float32)
    out_big = hdy_forward(x_big)
    jax.block_until_ready(out_big)
    assert out_big.shape == x_big.shape
    assert out_big.dtype == x_big.dtype
    assert jnp.allclose(out_big, x_big + 1.0), "Pallas add-one mismatch"

    print("KERNEL_OK")
</pallas_src>

<mosaic_0001>
module attributes {stable_mosaic.version = 11 : i64} {
  func.func @_add_one_kernel(%arg0: i32, %arg1: memref<256x1024xf32, #tpu.memory_space<vmem>>, %arg2: memref<256x1024xf32, #tpu.memory_space<vmem>>) attributes {dimension_semantics = [#tpu.dimension_semantics<parallel>], iteration_bounds = array<i64: 2>, scalar_prefetch = 0 : i64, scratch_operands = 0 : i64, tpu.core_type = #tpu.core_type<tc>, window_params = [{transform_indices = @transform_0, window_bounds = array<i64: 256, 1024>}, {transform_indices = @transform_1, window_bounds = array<i64: 256, 1024>}]} {
    %c0 = arith.constant 0 : index
    %c0_0 = arith.constant 0 : index
    %0 = vector.load %arg1[%c0, %c0_0] : memref<256x1024xf32, #tpu.memory_space<vmem>>, vector<256x1024xf32>
    %cst = arith.constant 1.000000e+00 : f32
    %1 = vector.broadcast %cst : f32 to vector<256x1024xf32>
    %2 = arith.addf %0, %1 : vector<256x1024xf32>
    %c0_1 = arith.constant 0 : index
    %c0_2 = arith.constant 0 : index
    %3 = vector.load %arg2[%c0_1, %c0_2] : memref<256x1024xf32, #tpu.memory_space<vmem>>, vector<256x1024xf32>
    tpu.vector_store %arg2[%c0_1, %c0_2], %2 {strides = array<i32>} : memref<256x1024xf32, #tpu.memory_space<vmem>>, vector<256x1024xf32>,
    return
  }
  func.func @transform_0(%arg0: i32) -> (i32, i32) {
    %c0_i32 = arith.constant 0 : i32
    %c0_i32_0 = arith.constant 0 : i32
    return %arg0, %c0_i32 : i32, i32
  }
  func.func @transform_1(%arg0: i32) -> (i32, i32) {
    %c0_i32 = arith.constant 0 : i32
    %c0_i32_0 = arith.constant 0 : i32
    return %arg0, %c0_i32 : i32, i32
  }
}

</mosaic_0001>

<llo_original>
// kernel: tpu_custom_call.1
$region0: #{tpu_custom_call.1}
  #allocation0 [shape = 'u32[]', space=smem, size = 0x4, offset = 0x4, fixed_abs, tag = 'smem constant byte address 0x4 - core index']
  #allocation1 [shape = 'u32[144,128]{1,0:T(1,128)}', space=vmem, size = 0x12000, scoped, tag = 'internal scratch']
  %s0 = inlined_call_operand.hbm [shape: f32[512,1024], index: 0, kind: input, shape index: {}]
  %s1 = inlined_call_operand.hbm [shape: f32[512,1024], index: 1, kind: output, shape index: {}]
  %s2 = sld [smem:[#allocation0]]
  $region41: #{tpu_custom_call.1} parent=0
    _
  %s4 = ssub.s32 1, %s2
  %s5 = scalar_select 0, %s4, %s2
  $region1: #{tpu_custom_call.1} parent=0
    #allocation2 [shape = 'u8[2097152]{0}', space=vmem, size = 0x200000, scoped, tag = 'input window, operand 0']
    #allocation3 [shape = 's32[2]{0}', space=sflag, size = 0x8, scoped, tag = 'scoped memory for tpu_custom_call.1']
    #allocation4 [shape = 's32[2]{0}', space=sflag, size = 0x8, scoped, tag = 'scoped memory for tpu_custom_call.1']
    #allocation5 [shape = 'u8[2097152]{0}', space=vmem, size = 0x200000, scoped, tag = 'output window, operand 0']
    %6 = vsyncpa [#allocation3], 0
    %s7 = scalar_lea.sflag [#allocation3], 1
    %8 = vsyncpa %s7, 0
    %9 = vsyncpa [#allocation4], 0
    %s10 = scalar_lea.sflag [#allocation4], 1
    %11 = vsyncpa %s10, 0
    loop: start=0, step=1, limit=4
    $region2: #{tpu_custom_call.1} parent=1 // loop_pre_header
      _
    $region3: #{tpu_custom_call.1} parent=1 // loop_header
      %s13 = sphi 0, %s17
      %p14 = scmp.ge.s32.totalorder %s13, 4
      %s23 = sphi 0, %s25
      %s26 = sphi 0, %s23
      %s27 = sphi 0, %s26
      %s43 = sphi 0, %s27
      %s49 = sphi 0, %s51
      %s52 = sphi 0, %s49
      %s53 = sphi 0, %s52
      %s69 = sphi 0, %s53
    $region4: #{tpu_custom_call.1} parent=1 // loop_header_branch
      %16 = sbr.rel (%p14) target = $region8
    $region5: #{tpu_custom_call.1} parent=1 // loop_body
      %s18 = ssub.s32 %s13, 1
      %s19 = ssub.s32 %s13, 2
      %s20 = sadd.s32 %s13, 1
      %s21 = ssub.s32 %s13, %s20
      %p22 = scmp.eq.s32.totalorder %s21, 0
      %s24 = sadd.s32 %s23, 1
      %s25 = scalar_select %p22, %s23, %s24
      %p28 = pneg %p22
      %p29 = scmp.eq.s32.totalorder %s13, 1
      %p30 = por %p28, %p29
      %p31 = scmp.ne.s32.totalorder %s23, %s26
      %p32 = scmp.eq.s32.totalorder %s13, 0
      %p33 = por %p31, %p32
      %p34 = scmp.ne.s32.totalorder %s23, %s26
      %p35 = scmp.eq.s32.totalorder %s18, 1
      %p36 = por %p34, %p35
      %p37 = scmp.ne.s32.totalorder %s26, %s27
      %p38 = scmp.eq.s32.totalorder %s18, 0
      %p39 = por %p37, %p38
      %p40 = scmp.ne.s32.totalorder %s26, %s27
      %p41 = scmp.eq.s32.totalorder %s19, 1
      %p42 = por %p40, %p41
      %p44 = scmp.ne.s32.totalorder %s27, %s43
      %p45 = scmp.eq.s32.totalorder %s19, 0
      %p46 = por %p44, %p45
      %s47 = ssub.s32 %s13, %s20
      %p48 = scmp.eq.s32.totalorder %s47, 0
      %s50 = sadd.s32 %s49, 1
      %s51 = scalar_select %p48, %s49, %s50
      %p54 = pneg %p48
      %p55 = scmp.eq.s32.totalorder %s13, 1
      %p56 = por %p54, %p55
      %p57 = scmp.ne.s32.totalorder %s49, %s52
      %p58 = scmp.eq.s32.totalorder %s13, 0
      %p59 = por %p57, %p58
      %p60 = scmp.ne.s32.totalorder %s49, %s52
      %p61 = scmp.eq.s32.totalorder %s18, 1
      %p62 = por %p60, %p61
      %p63 = scmp.ne.s32.totalorder %s52, %s53
      %p64 = scmp.eq.s32.totalorder %s18, 0
      %p65 = por %p63, %p64
      %p66 = scmp.ne.s32.totalorder %s52, %s53
      %p67 = scmp.eq.s32.totalorder %s19, 1
      %p68 = por %p66, %p67
      %p70 = scmp.ne.s32.totalorder %s53, %s69
      %p71 = scmp.eq.s32.totalorder %s19, 0
      %p72 = por %p70, %p71
      %p73 = scmp.le.s32.totalorder 1, %s13
      %p74 = scmp.lt.s32.totalorder %s13, 3
      %p75 = pnand %p73, %p74
      %p76 = pneg %p75
      // Predicated region
      $region9: #{tpu_custom_call.1} parent=5 // pred_check
        _
      $region10: #{tpu_custom_call.1} parent=5 // pred_check_branch
        %78 = sbr.rel (%p75) target = $region12
      $region11: #{tpu_custom_call.1} parent=5 // pred_region
        %s79 = ssub.s32 %s13, 1
      $region12: #{tpu_custom_call.1} parent=5 // pred_fallthru
        _
      %p80 = scmp.lt.s32.totalorder %s13, 2
      // Predicated region
      $region13: #{tpu_custom_call.1} parent=5 // pred_check
        %p81 = pneg %p80
      $region14: #{tpu_custom_call.1} parent=5 // pred_check_branch
        %83 = sbr.rel (%p81) target = $region16
      $region15: #{tpu_custom_call.1} parent=5 // pred_region
        // Predicated region
        $region17: #{tpu_custom_call.1} parent=15 // pred_check
          %p84 = pneg %p33
        $region18: #{tpu_custom_call.1} parent=15 // pred_check_branch
          %86 = sbr.rel (%p84) target = $region20
        $region19: #{tpu_custom_call.1} parent=15 // pred_region
          %s87 = sand.u32 %s23, 1
          %s88 = scalar_lea.sflag [#allocation3], %s87
          %s89 = sand.u32 %s23, 1
          %s90 = smul.addr %s89, 2048
          %s91 = scalar_lea.vmem [#allocation2], %s90
          %s92 = smul.u32 32, %s13
          %s94 = ssub.s32 32768, 32768
          %95 = vsyncadd %s88, %s94
          %s96 = smul.addr %s92, 8
          %s97 = smul.addr %s96, 128
          %s98 = scalar_lea.hbm %s0, %s97
          %s99 = sshll.u32 %s91, 4
          %s100 = int_to_ptr.vmem [resolvable:$true] %s99
          %105 = dma.hbm_to_vmem [thread:$0]  %s98, 32768, %s100, %s88, 1024, 1024, 64
        $region20: #{tpu_custom_call.1} parent=15 // pred_fallthru
          _
      $region16: #{tpu_custom_call.1} parent=5 // pred_fallthru
        _
      %p106 = scmp.le.s32.totalorder 1, %s13
      %p107 = scmp.lt.s32.totalorder %s13, 3
      %p108 = pnand %p106, %p107
      %p109 = pneg %p108
      // Predicated region
      $region21: #{tpu_custom_call.1} parent=5 // pred_check
        _
      $region22: #{tpu_custom_call.1} parent=5 // pred_check_branch
        %111 = sbr.rel (%p108) target = $region24
      $region23: #{tpu_custom_call.1} parent=5 // pred_region
        %s112 = ssub.s32 %s13, 1
        %s113 = sand.u32 %s26, 1
        %s114 = scalar_lea.sflag [#allocation3], %s113
        %s115 = sand.u32 %s26, 1
        %s116 = smul.addr %s115, 2048
        %s117 = scalar_lea.vmem [#allocation2], %s116
        // Predicated region
        $region25: #{tpu_custom_call.1} parent=23 // pred_check
          %p118 = pneg %p39
        $region26: #{tpu_custom_call.1} parent=23 // pred_check_branch
          %120 = sbr.rel (%p118) target = $region28
        $region27: #{tpu_custom_call.1} parent=23 // pred_region
          %121 = dma.done %s114, 32768
        $region28: #{tpu_custom_call.1} parent=23 // pred_fallthru
          _
        %s122 = sand.u32 %s26, 1
        %s123 = scalar_lea.sflag [#allocation3], %s122
        %s124 = sand.u32 %s26, 1
        %s125 = smul.addr %s124, 2048
        %s126 = scalar_lea.vmem [#allocation2], %s125
        %p127 = pneg %p39
        %p128 = pneg %p36
        %p129 = pneg %p65
        %p130 = pneg %p62
        %s131 = sand.u32 %s52, 1
        %s132 = scalar_lea.sflag [#allocation4], %s131
        %s133 = sand.u32 %s52, 1
        %s134 = smul.addr %s133, 2048
        %s135 = scalar_lea.vmem [#allocation5], %s134
        %s136 = smul.u32 32, %s18
        %s137 = smul.u32 32, %s18
        %v138 = vld [vmem:[%s117] sm:$0xff]
        %v139 = vld [vmem:[%s117 + $0x8] sm:$0xff]
        %v140 = vld [vmem:[%s117 + $0x10] sm:$0xff]
        %v141 = vld [vmem:[%s117 + $0x18] sm:$0xff]
        %v142 = vld [vmem:[%s117 + $0x20] sm:$0xff]
        %v143 = vld [vmem:[%s117 + $0x28] sm:$0xff]
        %v144 = vld [vmem:[%s117 + $0x30] sm:$0xff]
        %v145 = vld [vmem:[%s117 + $0x38] sm:$0xff]
        %v146 = vld [vmem:[%s117 + $0x40] sm:$0xff]
        %v147 = vld [vmem:[%s117 + $0x48] sm:$0xff]
        %v148 = vld [vmem:[%s117 + $0x50] sm:$0xff]
        %v149 = vld [vmem:[%s117 + $0x58] sm:$0xff]
        %v150 = vld [vmem:[%s117 + $0x60] sm:$0xff]
        %v151 = vld [vmem:[%s117 + $0x68] sm:$0xff]
        %v152 = vld [vmem:[%s117 + $0x70] sm:$0xff]
        %v153 = vld [vmem:[%s117 + $0x78] sm:$0xff]
        %v154 = vld [vmem:[%s117 + $0x80] sm:$0xff]
        %v155 = vld [vmem:[%s117 + $0x88] sm:$0xff]
        %v156 = vld [vmem:[%s117 + $0x90] sm:$0xff]
        %v157 = vld [vmem:[%s117 + $0x98] sm:$0xff]
        %v158 = vld [vmem:[%s117 + $0xa0] sm:$0xff]
        %v159 = vld [vmem:[%s117 + $0xa8] sm:$0xff]
        %v160 = vld [vmem:[%s117 + $0xb0] sm:$0xff]
        %v161 = vld [vmem:[%s117 + $0xb8] sm:$0xff]
        %v162 = vld [vmem:[%s117 + $0xc0] sm:$0xff]
        %v163 = vld [vmem:[%s117 + $0xc8] sm:$0xff]
        %v164 = vld [vmem:[%s117 + $0xd0] sm:$0xff]
        %v165 = vld [vmem:[%s117 + $0xd8] sm:$0xff]
        %v166 = vld [vmem:[%s117 + $0xe0] sm:$0xff]
        %v167 = vld [vmem:[%s117 + $0xe8] sm:$0xff]
        %v168 = vld [vmem:[%s117 + $0xf0] sm:$0xff]
        %v169 = vld [vmem:[%s117 + $0xf8] sm:$0xff]
        %v170 = vld [vmem:[%s117 + $0x100] sm:$0xff]
        %v171 = vld [vmem:[%s117 + $0x108] sm:$0xff]
        %v172 = vld [vmem:[%s117 + $0x110] sm:$0xff]
        %v173 = vld [vmem:[%s117 + $0x118] sm:$0xff]
        %v174 = vld [vmem:[%s117 + $0x120] sm:$0xff]
        %v175 = vld [vmem:[%s117 + $0x128] sm:$0xff]
        %v176 = vld [vmem:[%s117 + $0x130] sm:$0xff]
        %v177 = vld [vmem:[%s117 + $0x138] sm:$0xff]
        %v178 = vld [vmem:[%s117 + $0x140] sm:$0xff]
        %v179 = vld [vmem:[%s117 + $0x148] sm:$0xff]
        %v180 = vld [vmem:[%s117 + $0x150] sm:$0xff]
        %v181 = vld [vmem:[%s117 + $0x158] sm:$0xff]
        %v182 = vld [vmem:[%s117 + $0x160] sm:$0xff]
        %v183 = vld [vmem:[%s117 + $0x168] sm:$0xff]
        %v184 = vld [vmem:[%s117 + $0x170] sm:$0xff]
        %v185 = vld [vmem:[%s117 + $0x178] sm:$0xff]
        %v186 = vld [vmem:[%s117 + $0x180] sm:$0xff]
        %v187 = vld [vmem:[%s117 + $0x188] sm:$0xff]
        %v188 = vld [vmem:[%s117 + $0x190] sm:$0xff]
        %v189 = vld [vmem:[%s117 + $0x198] sm:$0xff]
        %v190 = vld [vmem:[%s117 + $0x1a0] sm:$0xff]
        %v191 = vld [vmem:[%s117 + $0x1a8] sm:$0xff]
        %v192 = vld [vmem:[%s117 + $0x1b0] sm:$0xff]
        %v193 = vld [vmem:[%s117 + $0x1b8] sm:$0xff]
        %v194 = vld [vmem:[%s117 + $0x1c0] sm:$0xff]
        %v195 = vld [vmem:[%s117 + $0x1c8] sm:$0xff]
        %v196 = vld [vmem:[%s117 + $0x1d0] sm:$0xff]
        %v197 = vld [vmem:[%s117 + $0x1d8] sm:$0xff]
        %v198 = vld [vmem:[%s117 + $0x1e0] sm:$0xff]
        %v199 = vld [vmem:[%s117 + $0x1e8] sm:$0xff]
        %v200 = vld [vmem:[%s117 + $0x1f0] sm:$0xff]
        %v201 = vld [vmem:[%s117 + $0x1f8] sm:$0xff]
        %v202 = vld [vmem:[%s117 + $0x200] sm:$0xff]
        %v203 = vld [vmem:[%s117 + $0x208] sm:$0xff]
        %v204 = vld [vmem:[%s117 + $0x210] sm:$0xff]
        %v205 = vld [vmem:[%s117 + $0x218] sm:$0xff]
        %v206 = vld [vmem:[%s117 + $0x220] sm:$0xff]
        %v207 = vld [vmem:[%s117 + $0x228] sm:$0xff]
        %v208 = vld [vmem:[%s117 + $0x230] sm:$0xff]
        %v209 = vld [vmem:[%s117 + $0x238] sm:$0xff]
        %v210 = vld [vmem:[%s117 + $0x240] sm:$0xff]
        %v211 = vld [vmem:[%s117 + $0x248] sm:$0xff]
        %v212 = vld [vmem:[%s117 + $0x250] sm:$0xff]
        %v213 = vld [vmem:[%s117 + $0x258] sm:$0xff]
        %v214 = vld [vmem:[%s117 + $0x260] sm:$0xff]
        %v215 = vld [vmem:[%s117 + $0x268] sm:$0xff]
        %v216 = vld [vmem:[%s117 + $0x270] sm:$0xff]
        %v217 = vld [vmem:[%s117 + $0x278] sm:$0xff]
        %v218 = vld [vmem:[%s117 + $0x280] sm:$0xff]
        %v219 = vld [vmem:[%s117 + $0x288] sm:$0xff]
        %v220 = vld [vmem:[%s117 + $0x290] sm:$0xff]
        %v221 = vld [vmem:[%s117 + $0x298] sm:$0xff]
        %v222 = vld [vmem:[%s117 + $0x2a0] sm:$0xff]
        %v223 = vld [vmem:[%s117 + $0x2a8] sm:$0xff]
        %v224 = vld [vmem:[%s117 + $0x2b0] sm:$0xff]
        %v225 = vld [vmem:[%s117 + $0x2b8] sm:$0xff]
        %v226 = vld [vmem:[%s117 + $0x2c0] sm:$0xff]
        %v227 = vld [vmem:[%s117 + $0x2c8] sm:$0xff]
        %v228 = vld [vmem:[%s117 + $0x2d0] sm:$0xff]
        %v229 = vld [vmem:[%s117 + $0x2d8] sm:$0xff]
        %v230 = vld [vmem:[%s117 + $0x2e0] sm:$0xff]
        %v231 = vld [vmem:[%s117 + $0x2e8] sm:$0xff]
        %v232 = vld [vmem:[%s117 + $0x2f0] sm:$0xff]
        %v233 = vld [vmem:[%s117 + $0x2f8] sm:$0xff]
        %v234 = vld [vmem:[%s117 + $0x300] sm:$0xff]
        %v235 = vld [vmem:[%s117 + $0x308] sm:$0xff]
        %v236 = vld [vmem:[%s117 + $0x310] sm:$0xff]
        %v237 = vld [vmem:[%s117 + $0x318] sm:$0xff]
        %v238 = vld [vmem:[%s117 + $0x320] sm:$0xff]
        %v239 = vld [vmem:[%s117 + $0x328] sm:$0xff]
        %v240 = vld [vmem:[%s117 + $0x330] sm:$0xff]
        %v241 = vld [vmem:[%s117 + $0x338] sm:$0xff]
        %v242 = vld [vmem:[%s117 + $0x340] sm:$0xff]
        %v243 = vld [vmem:[%s117 + $0x348] sm:$0xff]
        %v244 = vld [vmem:[%s117 + $0x350] sm:$0xff]
        %v245 = vld [vmem:[%s117 + $0x358] sm:$0xff]
        %v246 = vld [vmem:[%s117 + $0x360] sm:$0xff]
        %v247 = vld [vmem:[%s117 + $0x368] sm:$0xff]
        %v248 = vld [vmem:[%s117 + $0x370] sm:$0xff]
        %v249 = vld [vmem:[%s117 + $0x378] sm:$0xff]
        %v250 = vld [vmem:[%s117 + $0x380] sm:$0xff]
        %v251 = vld [vmem:[%s117 + $0x388] sm:$0xff]
        %v252 = vld [vmem:[%s117 + $0x390] sm:$0xff]
        %v253 = vld [vmem:[%s117 + $0x398] sm:$0xff]
        %v254 = vld [vmem:[%s117 + $0x3a0] sm:$0xff]
        %v255 = vld [vmem:[%s117 + $0x3a8] sm:$0xff]
        %v256 = vld [vmem:[%s117 + $0x3b0] sm:$0xff]
        %v257 = vld [vmem:[%s117 + $0x3b8] sm:$0xff]
        %v258 = vld [vmem:[%s117 + $0x3c0] sm:$0xff]
        %v259 = vld [vmem:[%s117 + $0x3c8] sm:$0xff]
        %v260 = vld [vmem:[%s117 + $0x3d0] sm:$0xff]
        %v261 = vld [vmem:[%s117 + $0x3d8] sm:$0xff]
        %v262 = vld [vmem:[%s117 + $0x3e0] sm:$0xff]
        %v263 = vld [vmem:[%s117 + $0x3e8] sm:$0xff]
        %v264 = vld [vmem:[%s117 + $0x3f0] sm:$0xff]
        %v265 = vld [vmem:[%s117 + $0x3f8] sm:$0xff]
        %v266 = vld [vmem:[%s117 + $0x400] sm:$0xff]
        %v267 = vld [vmem:[%s117 + $0x408] sm:$0xff]
        %v268 = vld [vmem:[%s117 + $0x410] sm:$0xff]
        %v269 = vld [vmem:[%s117 + $0x418] sm:$0xff]
        %v270 = vld [vmem:[%s117 + $0x420] sm:$0xff]
        %v271 = vld [vmem:[%s117 + $0x428] sm:$0xff]
        %v272 = vld [vmem:[%s117 + $0x430] sm:$0xff]
        %v273 = vld [vmem:[%s117 + $0x438] sm:$0xff]
        %v274 = vld [vmem:[%s117 + $0x440] sm:$0xff]
        %v275 = vld [vmem:[%s117 + $0x448] sm:$0xff]
        %v276 = vld [vmem:[%s117 + $0x450] sm:$0xff]
        %v277 = vld [vmem:[%s117 + $0x458] sm:$0xff]
        %v278 = vld [vmem:[%s117 + $0x460] sm:$0xff]
        %v279 = vld [vmem:[%s117 + $0x468] sm:$0xff]
        %v280 = vld [vmem:[%s117 + $0x470] sm:$0xff]
        %v281 = vld [vmem:[%s117 + $0x478] sm:$0xff]
        %v282 = vld [vmem:[%s117 + $0x480] sm:$0xff]
        %v283 = vld [vmem:[%s117 + $0x488] sm:$0xff]
        %v284 = vld [vmem:[%s117 + $0x490] sm:$0xff]
        %v285 = vld [vmem:[%s117 + $0x498] sm:$0xff]
        %v286 = vld [vmem:[%s117 + $0x4a0] sm:$0xff]
        %v287 = vld [vmem:[%s117 + $0x4a8] sm:$0xff]
        %v288 = vld [vmem:[%s117 + $0x4b0] sm:$0xff]
        %v289 = vld [vmem:[%s117 + $0x4b8] sm:$0xff]
        %v290 = vld [vmem:[%s117 + $0x4c0] sm:$0xff]
        %v291 = vld [vmem:[%s117 + $0x4c8] sm:$0xff]
        %v292 = vld [vmem:[%s117 + $0x4d0] sm:$0xff]
        %v293 = vld [vmem:[%s117 + $0x4d8] sm:$0xff]
        %v294 = vld [vmem:[%s117 + $0x4e0] sm:$0xff]
        %v295 = vld [vmem:[%s117 + $0x4e8] sm:$0xff]
        %v296 = vld [vmem:[%s117 + $0x4f0] sm:$0xff]
        %v297 = vld [vmem:[%s117 + $0x4f8] sm:$0xff]
        %v298 = vld [vmem:[%s117 + $0x500] sm:$0xff]
        %v299 = vld [vmem:[%s117 + $0x508] sm:$0xff]
        %v300 = vld [vmem:[%s117 + $0x510] sm:$0xff]
        %v301 = vld [vmem:[%s117 + $0x518] sm:$0xff]
        %v302 = vld [vmem:[%s117 + $0x520] sm:$0xff]
        %v303 = vld [vmem:[%s117 + $0x528] sm:$0xff]
        %v304 = vld [vmem:[%s117 + $0x530] sm:$0xff]
        %v305 = vld [vmem:[%s117 + $0x538] sm:$0xff]
        %v306 = vld [vmem:[%s117 + $0x540] sm:$0xff]
        %v307 = vld [vmem:[%s117 + $0x548] sm:$0xff]
        %v308 = vld [vmem:[%s117 + $0x550] sm:$0xff]
        %v309 = vld [vmem:[%s117 + $0x558] sm:$0xff]
        %v310 = vld [vmem:[%s117 + $0x560] sm:$0xff]
        %v311 = vld [vmem:[%s117 + $0x568] sm:$0xff]
        %v312 = vld [vmem:[%s117 + $0x570] sm:$0xff]
        %v313 = vld [vmem:[%s117 + $0x578] sm:$0xff]
        %v314 = vld [vmem:[%s117 + $0x580] sm:$0xff]
        %v315 = vld [vmem:[%s117 + $0x588] sm:$0xff]
        %v316 = vld [vmem:[%s117 + $0x590] sm:$0xff]
        %v317 = vld [vmem:[%s117 + $0x598] sm:$0xff]
        %v318 = vld [vmem:[%s117 + $0x5a0] sm:$0xff]
        %v319 = vld [vmem:[%s117 + $0x5a8] sm:$0xff]
        %v320 = vld [vmem:[%s117 + $0x5b0] sm:$0xff]
        %v321 = vld [vmem:[%s117 + $0x5b8] sm:$0xff]
        %v322 = vld [vmem:[%s117 + $0x5c0] sm:$0xff]
        %v323 = vld [vmem:[%s117 + $0x5c8] sm:$0xff]
        %v324 = vld [vmem:[%s117 + $0x5d0] sm:$0xff]
        %v325 = vld [vmem:[%s117 + $0x5d8] sm:$0xff]
        %v326 = vld [vmem:[%s117 + $0x5e0] sm:$0xff]
        %v327 = vld [vmem:[%s117 + $0x5e8] sm:$0xff]
        %v328 = vld [vmem:[%s117 + $0x5f0] sm:$0xff]
        %v329 = vld [vmem:[%s117 + $0x5f8] sm:$0xff]
        %v330 = vld [vmem:[%s117 + $0x600] sm:$0xff]
        %v331 = vld [vmem:[%s117 + $0x608] sm:$0xff]
        %v332 = vld [vmem:[%s117 + $0x610] sm:$0xff]
        %v333 = vld [vmem:[%s117 + $0x618] sm:$0xff]
        %v334 = vld [vmem:[%s117 + $0x620] sm:$0xff]
        %v335 = vld [vmem:[%s117 + $0x628] sm:$0xff]
        %v336 = vld [vmem:[%s117 + $0x630] sm:$0xff]
        %v337 = vld [vmem:[%s117 + $0x638] sm:$0xff]
        %v338 = vld [vmem:[%s117 + $0x640] sm:$0xff]
        %v339 = vld [vmem:[%s117 + $0x648] sm:$0xff]
        %v340 = vld [vmem:[%s117 + $0x650] sm:$0xff]
        %v341 = vld [vmem:[%s117 + $0x658] sm:$0xff]
        %v342 = vld [vmem:[%s117 + $0x660] sm:$0xff]
        %v343 = vld [vmem:[%s117 + $0x668] sm:$0xff]
        %v344 = vld [vmem:[%s117 + $0x670] sm:$0xff]
        %v345 = vld [vmem:[%s117 + $0x678] sm:$0xff]
        %v346 = vld [vmem:[%s117 + $0x680] sm:$0xff]
        %v347 = vld [vmem:[%s117 + $0x688] sm:$0xff]
        %v348 = vld [vmem:[%s117 + $0x690] sm:$0xff]
        %v349 = vld [vmem:[%s117 + $0x698] sm:$0xff]
        %v350 = vld [vmem:[%s117 + $0x6a0] sm:$0xff]
        %v351 = vld [vmem:[%s117 + $0x6a8] sm:$0xff]
        %v352 = vld [vmem:[%s117 + $0x6b0] sm:$0xff]
        %v353 = vld [vmem:[%s117 + $0x6b8] sm:$0xff]
        %v354 = vld [vmem:[%s117 + $0x6c0] sm:$0xff]
        %v355 = vld [vmem:[%s117 + $0x6c8] sm:$0xff]
        %v356 = vld [vmem:[%s117 + $0x6d0] sm:$0xff]
        %v357 = vld [vmem:[%s117 + $0x6d8] sm:$0xff]
        %v358 = vld [vmem:[%s117 + $0x6e0] sm:$0xff]
        %v359 = vld [vmem:[%s117 + $0x6e8] sm:$0xff]
        %v360 = vld [vmem:[%s117 + $0x6f0] sm:$0xff]
        %v361 = vld [vmem:[%s117 + $0x6f8] sm:$0xff]
        %v362 = vld [vmem:[%s117 + $0x700] sm:$0xff]
        %v363 = vld [vmem:[%s117 + $0x708] sm:$0xff]
        %v364 = vld [vmem:[%s117 + $0x710] sm:$0xff]
        %v365 = vld [vmem:[%s117 + $0x718] sm:$0xff]
        %v366 = vld [vmem:[%s117 + $0x720] sm:$0xff]
        %v367 = vld [vmem:[%s117 + $0x728] sm:$0xff]
        %v368 = vld [vmem:[%s117 + $0x730] sm:$0xff]
        %v369 = vld [vmem:[%s117 + $0x738] sm:$0xff]
        %v370 = vld [vmem:[%s117 + $0x740] sm:$0xff]
        %v371 = vld [vmem:[%s117 + $0x748] sm:$0xff]
        %v372 = vld [vmem:[%s117 + $0x750] sm:$0xff]
        %v373 = vld [vmem:[%s117 + $0x758] sm:$0xff]
        %v374 = vld [vmem:[%s117 + $0x760] sm:$0xff]
        %v375 = vld [vmem:[%s117 + $0x768] sm:$0xff]
        %v376 = vld [vmem:[%s117 + $0x770] sm:$0xff]
        %v377 = vld [vmem:[%s117 + $0x778] sm:$0xff]
        %v378 = vld [vmem:[%s117 + $0x780] sm:$0xff]
        %v379 = vld [vmem:[%s117 + $0x788] sm:$0xff]
        %v380 = vld [vmem:[%s117 + $0x790] sm:$0xff]
        %v381 = vld [vmem:[%s117 + $0x798] sm:$0xff]
        %v382 = vld [vmem:[%s117 + $0x7a0] sm:$0xff]
        %v383 = vld [vmem:[%s117 + $0x7a8] sm:$0xff]
        %v384 = vld [vmem:[%s117 + $0x7b0] sm:$0xff]
        %v385 = vld [vmem:[%s117 + $0x7b8] sm:$0xff]
        %v386 = vld [vmem:[%s117 + $0x7c0] sm:$0xff]
        %v387 = vld [vmem:[%s117 + $0x7c8] sm:$0xff]
        %v388 = vld [vmem:[%s117 + $0x7d0] sm:$0xff]
        %v389 = vld [vmem:[%s117 + $0x7d8] sm:$0xff]
        %v390 = vld [vmem:[%s117 + $0x7e0] sm:$0xff]
        %v391 = vld [vmem:[%s117 + $0x7e8] sm:$0xff]
        %v392 = vld [vmem:[%s117 + $0x7f0] sm:$0xff]
        %v393 = vld [vmem:[%s117 + $0x7f8] sm:$0xff]
        %v394 = vadd.f32 %v138, 1.0
        %v395 = vadd.f32 %v139, 1.0
        %v396 = vadd.f32 %v140, 1.0
        %v397 = vadd.f32 %v141, 1.0
        %v398 = vadd.f32 %v142, 1.0
        %v399 = vadd.f32 %v143, 1.0
        %v400 = vadd.f32 %v144, 1.0
        %v401 = vadd.f32 %v145, 1.0
        %v402 = vadd.f32 %v146, 1.0
        %v403 = vadd.f32 %v147, 1.0
        %v404 = vadd.f32 %v148, 1.0
        %v405 = vadd.f32 %v149, 1.0
        %v406 = vadd.f32 %v150, 1.0
        %v407 = vadd.f32 %v151, 1.0
        %v408 = vadd.f32 %v152, 1.0
        %v409 = vadd.f32 %v153, 1.0
        %v410 = vadd.f32 %v154, 1.0
        %v411 = vadd.f32 %v155, 1.0
        %v412 = vadd.f32 %v156, 1.0
        %v413 = vadd.f32 %v157, 1.0
        %v414 = vadd.f32 %v158, 1.0
        %v415 = vadd.f32 %v159, 1.0
        %v416 = vadd.f32 %v160, 1.0
        %v417 = vadd.f32 %v161, 1.0
        %v418 = vadd.f32 %v162, 1.0
        %v419 = vadd.f32 %v163, 1.0
        %v420 = vadd.f32 %v164, 1.0
        %v421 = vadd.f32 %v165, 1.0
        %v422 = vadd.f32 %v166, 1.0
        %v423 = vadd.f32 %v167, 1.0
        %v424 = vadd.f32 %v168, 1.0
        %v425 = vadd.f32 %v169, 1.0
        %v426 = vadd.f32 %v170, 1.0
        %v427 = vadd.f32 %v171, 1.0
        %v428 = vadd.f32 %v172, 1.0
        %v429 = vadd.f32 %v173, 1.0
        %v430 = vadd.f32 %v174, 1.0
        %v431 = vadd.f32 %v175, 1.0
        %v432 = vadd.f32 %v176, 1.0
        %v433 = vadd.f32 %v177, 1.0
        %v434 = vadd.f32 %v178, 1.0
        %v435 = vadd.f32 %v179, 1.0
        %v436 = vadd.f32 %v180, 1.0
        %v437 = vadd.f32 %v181, 1.0
        %v438 = vadd.f32 %v182, 1.0
        %v439 = vadd.f32 %v183, 1.0
        %v440 = vadd.f32 %v184, 1.0
        %v441 = vadd.f32 %v185, 1.0
        %v442 = vadd.f32 %v186, 1.0
        %v443 = vadd.f32 %v187, 1.0
        %v444 = vadd.f32 %v188, 1.0
        %v445 = vadd.f32 %v189, 1.0
        %v446 = vadd.f32 %v190, 1.0
        %v447 = vadd.f32 %v191, 1.0
        %v448 = vadd.f32 %v192, 1.0
        %v449 = vadd.f32 %v193, 1.0
        %v450 = vadd.f32 %v194, 1.0
        %v451 = vadd.f32 %v195, 1.0
        %v452 = vadd.f32 %v196, 1.0
        %v453 = vadd.f32 %v197, 1.0
        %v454 = vadd.f32 %v198, 1.0
        %v455 = vadd.f32 %v199, 1.0
        %v456 = vadd.f32 %v200, 1.0
        %v457 = vadd.f32 %v201, 1.0
        %v458 = vadd.f32 %v202, 1.0
        %v459 = vadd.f32 %v203, 1.0
        %v460 = vadd.f32 %v204, 1.0
        %v461 = vadd.f32 %v205, 1.0
        %v462 = vadd.f32 %v206, 1.0
        %v463 = vadd.f32 %v207, 1.0
        %v464 = vadd.f32 %v208, 1.0
        %v465 = vadd.f32 %v209, 1.0
        %v466 = vadd.f32 %v210, 1.0
        %v467 = vadd.f32 %v211, 1.0
        %v468 = vadd.f32 %v212, 1.0
        %v469 = vadd.f32 %v213, 1.0
        %v470 = vadd.f32 %v214, 1.0
        %v471 = vadd.f32 %v215, 1.0
        %v472 = vadd.f32 %v216, 1.0
        %v473 = vadd.f32 %v217, 1.0
        %v474 = vadd.f32 %v218, 1.0
        %v475 = vadd.f32 %v219, 1.0
        %v476 = vadd.f32 %v220, 1.0
        %v477 = vadd.f32 %v221, 1.0
        %v478 = vadd.f32 %v222, 1.0
        %v479 = vadd.f32 %v223, 1.0
        %v480 = vadd.f32 %v224, 1.0
        %v481 = vadd.f32 %v225, 1.0
        %v482 = vadd.f32 %v226, 1.0
        %v483 = vadd.f32 %v227, 1.0
        %v484 = vadd.f32 %v228, 1.0
        %v485 = vadd.f32 %v229, 1.0
        %v486 = vadd.f32 %v230, 1.0
        %v487 = vadd.f32 %v231, 1.0
        %v488 = vadd.f32 %v232, 1.0
        %v489 = vadd.f32 %v233, 1.0
        %v490 = vadd.f32 %v234, 1.0
        %v491 = vadd.f32 %v235, 1.0
        %v492 = vadd.f32 %v236, 1.0
        %v493 = vadd.f32 %v237, 1.0
        %v494 = vadd.f32 %v238, 1.0
        %v495 = vadd.f32 %v239, 1.0
        %v496 = vadd.f32 %v240, 1.0
        %v497 = vadd.f32 %v241, 1.0
        %v498 = vadd.f32 %v242, 1.0
        %v499 = vadd.f32 %v243, 1.0
        %v500 = vadd.f32 %v244, 1.0
        %v501 = vadd.f32 %v245, 1.0
        %v502 = vadd.f32 %v246, 1.0
        %v503 = vadd.f32 %v247, 1.0
        %v504 = vadd.f32 %v248, 1.0
        %v505 = vadd.f32 %v249, 1.0
        %v506 = vadd.f32 %v250, 1.0
        %v507 = vadd.f32 %v251, 1.0
        %v508 = vadd.f32 %v252, 1.0
        %v509 = vadd.f32 %v253, 1.0
        %v510 = vadd.f32 %v254, 1.0
        %v511 = vadd.f32 %v255, 1.0
        %v512 = vadd.f32 %v256, 1.0
        %v513 = vadd.f32 %v257, 1.0
        %v514 = vadd.f32 %v258, 1.0
        %v515 = vadd.f32 %v259, 1.0
        %v516 = vadd.f32 %v260, 1.0
        %v517 = vadd.f32 %v261, 1.0
        %v518 = vadd.f32 %v262, 1.0
        %v519 = vadd.f32 %v263, 1.0
        %v520 = vadd.f32 %v264, 1.0
        %v521 = vadd.f32 %v265, 1.0
        %v522 = vadd.f32 %v266, 1.0
        %v523 = vadd.f32 %v267, 1.0
        %v524 = vadd.f32 %v268, 1.0
        %v525 = vadd.f32 %v269, 1.0
        %v526 = vadd.f32 %v270, 1.0
        %v527 = vadd.f32 %v271, 1.0
        %v528 = vadd.f32 %v272, 1.0
        %v529 = vadd.f32 %v273, 1.0
        %v530 = vadd.f32 %v274, 1.0
        %v531 = vadd.f32 %v275, 1.0
        %v532 = vadd.f32 %v276, 1.0
        %v533 = vadd.f32 %v277, 1.0
        %v534 = vadd.f32 %v278, 1.0
        %v535 = vadd.f32 %v279, 1.0
        %v536 = vadd.f32 %v280, 1.0
        %v537 = vadd.f32 %v281, 1.0
        %v538 = vadd.f32 %v282, 1.0
        %v539 = vadd.f32 %v283, 1.0
        %v540 = vadd.f32 %v284, 1.0
        %v541 = vadd.f32 %v285, 1.0
        %v542 = vadd.f32 %v286, 1.0
        %v543 = vadd.f32 %v287, 1.0
        %v544 = vadd.f32 %v288, 1.0
        %v545 = vadd.f32 %v289, 1.0
        %v546 = vadd.f32 %v290, 1.0
        %v547 = vadd.f32 %v291, 1.0
        %v548 = vadd.f32 %v292, 1.0
        %v549 = vadd.f32 %v293, 1.0
        %v550 = vadd.f32 %v294, 1.0
        %v551 = vadd.f32 %v295, 1.0
        %v552 = vadd.f32 %v296, 1.0
        %v553 = vadd.f32 %v297, 1.0
        %v554 = vadd.f32 %v298, 1.0
        %v555 = vadd.f32 %v299, 1.0
        %v556 = vadd.f32 %v300, 1.0
        %v557 = vadd.f32 %v301, 1.0
        %v558 = vadd.f32 %v302, 1.0
        %v559 = vadd.f32 %v303, 1.0
        %v560 = vadd.f32 %v304, 1.0
        %v561 = vadd.f32 %v305, 1.0
        %v562 = vadd.f32 %v306, 1.0
        %v563 = vadd.f32 %v307, 1.0
        %v564 = vadd.f32 %v308, 1.0
        %v565 = vadd.f32 %v309, 1.0
        %v566 = vadd.f32 %v310, 1.0
        %v567 = vadd.f32 %v311, 1.0
        %v568 = vadd.f32 %v312, 1.0
        %v569 = vadd.f32 %v313, 1.0
        %v570 = vadd.f32 %v314, 1.0
        %v571 = vadd.f32 %v315, 1.0
        %v572 = vadd.f32 %v316, 1.0
        %v573 = vadd.f32 %v317, 1.0
        %v574 = vadd.f32 %v318, 1.0
        %v575 = vadd.f32 %v319, 1.0
        %v576 = vadd.f32 %v320, 1.0
        %v577 = vadd.f32 %v321, 1.0
        %v578 = vadd.f32 %v322, 1.0
        %v579 = vadd.f32 %v323, 1.0
        %v580 = vadd.f32 %v324, 1.0
        %v581 = vadd.f32 %v325, 1.0
        %v582 = vadd.f32 %v326, 1.0
        %v583 = vadd.f32 %v327, 1.0
        %v584 = vadd.f32 %v328, 1.0
        %v585 = vadd.f32 %v329, 1.0
        %v586 = vadd.f32 %v330, 1.0
        %v587 = vadd.f32 %v331, 1.0
        %v588 = vadd.f32 %v332, 1.0
        %v589 = vadd.f32 %v333, 1.0
        %v590 = vadd.f32 %v334, 1.0
        %v591 = vadd.f32 %v335, 1.0
        %v592 = vadd.f32 %v336, 1.0
        %v593 = vadd.f32 %v337, 1.0
        %v594 = vadd.f32 %v338, 1.0
        %v595 = vadd.f32 %v339, 1.0
        %v596 = vadd.f32 %v340, 1.0
        %v597 = vadd.f32 %v341, 1.0
        %v598 = vadd.f32 %v342, 1.0
        %v599 = vadd.f32 %v343, 1.0
        %v600 = vadd.f32 %v344, 1.0
        %v601 = vadd.f32 %v345, 1.0
        %v602 = vadd.f32 %v346, 1.0
        %v603 = vadd.f32 %v347, 1.0
        %v604 = vadd.f32 %v348, 1.0
        %v605 = vadd.f32 %v349, 1.0
        %v606 = vadd.f32 %v350, 1.0
        %v607 = vadd.f32 %v351, 1.0
        %v608 = vadd.f32 %v352, 1.0
        %v609 = vadd.f32 %v353, 1.0
        %v610 = vadd.f32 %v354, 1.0
        %v611 = vadd.f32 %v355, 1.0
        %v612 = vadd.f32 %v356, 1.0
        %v613 = vadd.f32 %v357, 1.0
        %v614 = vadd.f32 %v358, 1.0
        %v615 = vadd.f32 %v359, 1.0
        %v616 = vadd.f32 %v360, 1.0
        %v617 = vadd.f32 %v361, 1.0
        %v618 = vadd.f32 %v362, 1.0
        %v619 = vadd.f32 %v363, 1.0
        %v620 = vadd.f32 %v364, 1.0
        %v621 = vadd.f32 %v365, 1.0
        %v622 = vadd.f32 %v366, 1.0
        %v623 = vadd.f32 %v367, 1.0
        %v624 = vadd.f32 %v368, 1.0
        %v625 = vadd.f32 %v369, 1.0
        %v626 = vadd.f32 %v370, 1.0
        %v627 = vadd.f32 %v371, 1.0
        %v628 = vadd.f32 %v372, 1.0
        %v629 = vadd.f32 %v373, 1.0
        %v630 = vadd.f32 %v374, 1.0
        %v631 = vadd.f32 %v375, 1.0
        %v632 = vadd.f32 %v376, 1.0
        %v633 = vadd.f32 %v377, 1.0
        %v634 = vadd.f32 %v378, 1.0
        %v635 = vadd.f32 %v379, 1.0
        %v636 = vadd.f32 %v380, 1.0
        %v637 = vadd.f32 %v381, 1.0
        %v638 = vadd.f32 %v382, 1.0
        %v639 = vadd.f32 %v383, 1.0
        %v640 = vadd.f32 %v384, 1.0
        %v641 = vadd.f32 %v385, 1.0
        %v642 = vadd.f32 %v386, 1.0
        %v643 = vadd.f32 %v387, 1.0
        %v644 = vadd.f32 %v388, 1.0
        %v645 = vadd.f32 %v389, 1.0
        %v646 = vadd.f32 %v390, 1.0
        %v647 = vadd.f32 %v391, 1.0
        %v648 = vadd.f32 %v392, 1.0
        %v649 = vadd.f32 %v393, 1.0
        %650 = vst [vmem:[%s135] sm:$0xff] %v394
        %651 = vst [vmem:[%s135 + $0x8] sm:$0xff] %v395
        %652 = vst [vmem:[%s135 + $0x10] sm:$0xff] %v396
        %653 = vst [vmem:[%s135 + $0x18] sm:$0xff] %v397
        %654 = vst [vmem:[%s135 + $0x20] sm:$0xff] %v398
        %655 = vst [vmem:[%s135 + $0x28] sm:$0xff] %v399
        %656 = vst [vmem:[%s135 + $0x30] sm:$0xff] %v400
        %657 = vst [vmem:[%s135 + $0x38] sm:$0xff] %v401
        %658 = vst [vmem:[%s135 + $0x40] sm:$0xff] %v402
        %659 = vst [vmem:[%s135 + $0x48] sm:$0xff] %v403
        %660 = vst [vmem:[%s135 + $0x50] sm:$0xff] %v404
        %661 = vst [vmem:[%s135 + $0x58] sm:$0xff] %v405
        %662 = vst [vmem:[%s135 + $0x60] sm:$0xff] %v406
        %663 = vst [vmem:[%s135 + $0x68] sm:$0xff] %v407
        %664 = vst [vmem:[%s135 + $0x70] sm:$0xff] %v408
        %665 = vst [vmem:[%s135 + $0x78] sm:$0xff] %v409
        %666 = vst [vmem:[%s135 + $0x80] sm:$0xff] %v410
        %667 = vst [vmem:[%s135 + $0x88] sm:$0xff] %v411
        %668 = vst [vmem:[%s135 + $0x90] sm:$0xff] %v412
        %669 = vst [vmem:[%s135 + $0x98] sm:$0xff] %v413
        %670 = vst [vmem:[%s135 + $0xa0] sm:$0xff] %v414
        %671 = vst [vmem:[%s135 + $0xa8] sm:$0xff] %v415
        %672 = vst [vmem:[%s135 + $0xb0] sm:$0xff] %v416
        %673 = vst [vmem:[%s135 + $0xb8] sm:$0xff] %v417
        %674 = vst [vmem:[%s135 + $0xc0] sm:$0xff] %v418
        %675 = vst [vmem:[%s135 + $0xc8] sm:$0xff] %v419
        %676 = vst [vmem:[%s135 + $0xd0] sm:$0xff] %v420
        %677 = vst [vmem:[%s135 + $0xd8] sm:$0xff] %v421
        %678 = vst [vmem:[%s135 + $0xe0] sm:$0xff] %v422
        %679 = vst [vmem:[%s135 + $0xe8] sm:$0xff] %v423
        %680 = vst [vmem:[%s135 + $0xf0] sm:$0xff] %v424
        %681 = vst [vmem:[%s135 + $0xf8] sm:$0xff] %v425
        %682 = vst [vmem:[%s135 + $0x100] sm:$0xff] %v426
        %683 = vst [vmem:[%s135 + $0x108] sm:$0xff] %v427
        %684 = vst [vmem:[%s135 + $0x110] sm:$0xff] %v428
        %685 = vst [vmem:[%s135 + $0x118] sm:$0xff] %v429
        %686 = vst [vmem:[%s135 + $0x120] sm:$0xff] %v430
        %687 = vst [vmem:[%s135 + $0x128] sm:$0xff] %v431
        %688 = vst [vmem:[%s135 + $0x130] sm:$0xff] %v432
        %689 = vst [vmem:[%s135 + $0x138] sm:$0xff] %v433
        %690 = vst [vmem:[%s135 + $0x140] sm:$0xff] %v434
        %691 = vst [vmem:[%s135 + $0x148] sm:$0xff] %v435
        %692 = vst [vmem:[%s135 + $0x150] sm:$0xff] %v436
        %693 = vst [vmem:[%s135 + $0x158] sm:$0xff] %v437
        %694 = vst [vmem:[%s135 + $0x160] sm:$0xff] %v438
        %695 = vst [vmem:[%s135 + $0x168] sm:$0xff] %v439
        %696 = vst [vmem:[%s135 + $0x170] sm:$0xff] %v440
        %697 = vst [vmem:[%s135 + $0x178] sm:$0xff] %v441
        %698 = vst [vmem:[%s135 + $0x180] sm:$0xff] %v442
        %699 = vst [vmem:[%s135 + $0x188] sm:$0xff] %v443
        %700 = vst [vmem:[%s135 + $0x190] sm:$0xff] %v444
        %701 = vst [vmem:[%s135 + $0x198] sm:$0xff] %v445
        %702 = vst [vmem:[%s135 + $0x1a0] sm:$0xff] %v446
        %703 = vst [vmem:[%s135 + $0x1a8] sm:$0xff] %v447
        %704 = vst [vmem:[%s135 + $0x1b0] sm:$0xff] %v448
        %705 = vst [vmem:[%s135 + $0x1b8] sm:$0xff] %v449
        %706 = vst [vmem:[%s135 + $0x1c0] sm:$0xff] %v450
        %707 = vst [vmem:[%s135 + $0x1c8] sm:$0xff] %v451
        %708 = vst [vmem:[%s135 + $0x1d0] sm:$0xff] %v452
        %709 = vst [vmem:[%s135 + $0x1d8] sm:$0xff] %v453
        %710 = vst [vmem:[%s135 + $0x1e0] sm:$0xff] %v454
        %711 = vst [vmem:[%s135 + $0x1e8] sm:$0xff] %v455
        %712 = vst [vmem:[%s135 + $0x1f0] sm:$0xff] %v456
        %713 = vst [vmem:[%s135 + $0x1f8] sm:$0xff] %v457
        %714 = vst [vmem:[%s135 + $0x200] sm:$0xff] %v458
        %715 = vst [vmem:[%s135 + $0x208] sm:$0xff] %v459
        %716 = vst [vmem:[%s135 + $0x210] sm:$0xff] %v460
        %717 = vst [vmem:[%s135 + $0x218] sm:$0xff] %v461
        %718 = vst [vmem:[%s135 + $0x220] sm:$0xff] %v462
        %719 = vst [vmem:[%s135 + $0x228] sm:$0xff] %v463
        %720 = vst [vmem:[%s135 + $0x230] sm:$0xff] %v464
        %721 = vst [vmem:[%s135 + $0x238] sm:$0xff] %v465
        %722 = vst [vmem:[%s135 + $0x240] sm:$0xff] %v466
        %723 = vst [vmem:[%s135 + $0x248] sm:$0xff] %v467
        %724 = vst [vmem:[%s135 + $0x250] sm:$0xff] %v468
        %725 = vst [vmem:[%s135 + $0x258] sm:$0xff] %v469
        %726 = vst [vmem:[%s135 + $0x260] sm:$0xff] %v470
        %727 = vst [vmem:[%s135 + $0x268] sm:$0xff] %v471
        %728 = vst [vmem:[%s135 + $0x270] sm:$0xff] %v472
        %729 = vst [vmem:[%s135 + $0x278] sm:$0xff] %v473
        %730 = vst [vmem:[%s135 + $0x280] sm:$0xff] %v474
        %731 = vst [vmem:[%s135 + $0x288] sm:$0xff] %v475
        %732 = vst [vmem:[%s135 + $0x290] sm:$0xff] %v476
        %733 = vst [vmem:[%s135 + $0x298] sm:$0xff] %v477
        %734 = vst [vmem:[%s135 + $0x2a0] sm:$0xff] %v478
        %735 = vst [vmem:[%s135 + $0x2a8] sm:$0xff] %v479
        %736 = vst [vmem:[%s135 + $0x2b0] sm:$0xff] %v480
        %737 = vst [vmem:[%s135 + $0x2b8] sm:$0xff] %v481
        %738 = vst [vmem:[%s135 + $0x2c0] sm:$0xff] %v482
        %739 = vst [vmem:[%s135 + $0x2c8] sm:$0xff] %v483
        %740 = vst [vmem:[%s135 + $0x2d0] sm:$0xff] %v484
        %741 = vst [vmem:[%s135 + $0x2d8] sm:$0xff] %v485
        %742 = vst [vmem:[%s135 + $0x2e0] sm:$0xff] %v486
        %743 = vst [vmem:[%s135 + $0x2e8] sm:$0xff] %v487
        %744 = vst [vmem:[%s135 + $0x2f0] sm:$0xff] %v488
        %745 = vst [vmem:[%s135 + $0x2f8] sm:$0xff] %v489
        %746 = vst [vmem:[%s135 + $0x300] sm:$0xff] %v490
        %747 = vst [vmem:[%s135 + $0x308] sm:$0xff] %v491
        %748 = vst [vmem:[%s135 + $0x310] sm:$0xff] %v492
        %749 = vst [vmem:[%s135 + $0x318] sm:$0xff] %v493
        %750 = vst [vmem:[%s135 + $0x320] sm:$0xff] %v494
        %751 = vst [vmem:[%s135 + $0x328] sm:$0xff] %v495
        %752 = vst [vmem:[%s135 + $0x330] sm:$0xff] %v496
        %753 = vst [vmem:[%s135 + $0x338] sm:$0xff] %v497
        %754 = vst [vmem:[%s135 + $0x340] sm:$0xff] %v498
        %755 = vst [vmem:[%s135 + $0x348] sm:$0xff] %v499
        %756 = vst [vmem:[%s135 + $0x350] sm:$0xff] %v500
        %757 = vst [vmem:[%s135 + $0x358] sm:$0xff] %v501
        %758 = vst [vmem:[%s135 + $0x360] sm:$0xff] %v502
        %759 = vst [vmem:[%s135 + $0x368] sm:$0xff] %v503
        %760 = vst [vmem:[%s135 + $0x370] sm:$0xff] %v504
        %761 = vst [vmem:[%s135 + $0x378] sm:$0xff] %v505
        %762 = vst [vmem:[%s135 + $0x380] sm:$0xff] %v506
        %763 = vst [vmem:[%s135 + $0x388] sm:$0xff] %v507
        %764 = vst [vmem:[%s135 + $0x390] sm:$0xff] %v508
        %765 = vst [vmem:[%s135 + $0x398] sm:$0xff] %v509
        %766 = vst [vmem:[%s135 + $0x3a0] sm:$0xff] %v510
        %767 = vst [vmem:[%s135 + $0x3a8] sm:$0xff] %v511
        %768 = vst [vmem:[%s135 + $0x3b0] sm:$0xff] %v512
        %769 = vst [vmem:[%s135 + $0x3b8] sm:$0xff] %v513
        %770 = vst [vmem:[%s135 + $0x3c0] sm:$0xff] %v514
        %771 = vst [vmem:[%s135 + $0x3c8] sm:$0xff] %v515
        %772 = vst [vmem:[%s135 + $0x3d0] sm:$0xff] %v516
        %773 = vst [vmem:[%s135 + $0x3d8] sm:$0xff] %v517
        %774 = vst [vmem:[%s135 + $0x3e0] sm:$0xff] %v518
        %775 = vst [vmem:[%s135 + $0x3e8] sm:$0xff] %v519
        %776 = vst [vmem:[%s135 + $0x3f0] sm:$0xff] %v520
        %777 = vst [vmem:[%s135 + $0x3f8] sm:$0xff] %v521
        %778 = vst [vmem:[%s135 + $0x400] sm:$0xff] %v522
        %779 = vst [vmem:[%s135 + $0x408] sm:$0xff] %v523
        %780 = vst [vmem:[%s135 + $0x410] sm:$0xff] %v524
        %781 = vst [vmem:[%s135 + $0x418] sm:$0xff] %v525
        %782 = vst [vmem:[%s135 + $0x420] sm:$0xff] %v526
        %783 = vst [vmem:[%s135 + $0x428] sm:$0xff] %v527
        %784 = vst [vmem:[%s135 + $0x430] sm:$0xff] %v528
        %785 = vst [vmem:[%s135 + $0x438] sm:$0xff] %v529
        %786 = vst [vmem:[%s135 + $0x440] sm:$0xff] %v530
        %787 = vst [vmem:[%s135 + $0x448] sm:$0xff] %v531
        %788 = vst [vmem:[%s135 + $0x450] sm:$0xff] %v532
        %789 = vst [vmem:[%s135 + $0x458] sm:$0xff] %v533
        %790 = vst [vmem:[%s135 + $0x460] sm:$0xff] %v534
        %791 = vst [vmem:[%s135 + $0x468] sm:$0xff] %v535
        %792 = vst [vmem:[%s135 + $0x470] sm:$0xff] %v536
        %793 = vst [vmem:[%s135 + $0x478] sm:$0xff] %v537
        %794 = vst [vmem:[%s135 + $0x480] sm:$0xff] %v538
        %795 = vst [vmem:[%s135 + $0x488] sm:$0xff] %v539
        %796 = vst [vmem:[%s135 + $0x490] sm:$0xff] %v540
        %797 = vst [vmem:[%s135 + $0x498] sm:$0xff] %v541
        %798 = vst [vmem:[%s135 + $0x4a0] sm:$0xff] %v542
        %799 = vst [vmem:[%s135 + $0x4a8] sm:$0xff] %v543
        %800 = vst [vmem:[%s135 + $0x4b0] sm:$0xff] %v544
        %801 = vst [vmem:[%s135 + $0x4b8] sm:$0xff] %v545
        %802 = vst [vmem:[%s135 + $0x4c0] sm:$0xff] %v546
        %803 = vst [vmem:[%s135 + $0x4c8] sm:$0xff] %v547
        %804 = vst [vmem:[%s135 + $0x4d0] sm:$0xff] %v548
        %805 = vst [vmem:[%s135 + $0x4d8] sm:$0xff] %v549
        %806 = vst [vmem:[%s135 + $0x4e0] sm:$0xff] %v550
        %807 = vst [vmem:[%s135 + $0x4e8] sm:$0xff] %v551
        %808 = vst [vmem:[%s135 + $0x4f0] sm:$0xff] %v552
        %809 = vst [vmem:[%s135 + $0x4f8] sm:$0xff] %v553
        %810 = vst [vmem:[%s135 + $0x500] sm:$0xff] %v554
        %811 = vst [vmem:[%s135 + $0x508] sm:$0xff] %v555
        %812 = vst [vmem:[%s135 + $0x510] sm:$0xff] %v556
        %813 = vst [vmem:[%s135 + $0x518] sm:$0xff] %v557
        %814 = vst [vmem:[%s135 + $0x520] sm:$0xff] %v558
        %815 = vst [vmem:[%s135 + $0x528] sm:$0xff] %v559
        %816 = vst [vmem:[%s135 + $0x530] sm:$0xff] %v560
        %817 = vst [vmem:[%s135 + $0x538] sm:$0xff] %v561
        %818 = vst [vmem:[%s135 + $0x540] sm:$0xff] %v562
        %819 = vst [vmem:[%s135 + $0x548] sm:$0xff] %v563
        %820 = vst [vmem:[%s135 + $0x550] sm:$0xff] %v564
        %821 = vst [vmem:[%s135 + $0x558] sm:$0xff] %v565
        %822 = vst [vmem:[%s135 + $0x560] sm:$0xff] %v566
        %823 = vst [vmem:[%s135 + $0x568] sm:$0xff] %v567
        %824 = vst [vmem:[%s135 + $0x570] sm:$0xff] %v568
        %825 = vst [vmem:[%s135 + $0x578] sm:$0xff] %v569
        %826 = vst [vmem:[%s135 + $0x580] sm:$0xff] %v570
        %827 = vst [vmem:[%s135 + $0x588] sm:$0xff] %v571
        %828 = vst [vmem:[%s135 + $0x590] sm:$0xff] %v572
        %829 = vst [vmem:[%s135 + $0x598] sm:$0xff] %v573
        %830 = vst [vmem:[%s135 + $0x5a0] sm:$0xff] %v574
        %831 = vst [vmem:[%s135 + $0x5a8] sm:$0xff] %v575
        %832 = vst [vmem:[%s135 + $0x5b0] sm:$0xff] %v576
        %833 = vst [vmem:[%s135 + $0x5b8] sm:$0xff] %v577
        %834 = vst [vmem:[%s135 + $0x5c0] sm:$0xff] %v578
        %835 = vst [vmem:[%s135 + $0x5c8] sm:$0xff] %v579
        %836 = vst [vmem:[%s135 + $0x5d0] sm:$0xff] %v580
        %837 = vst [vmem:[%s135 + $0x5d8] sm:$0xff] %v581
        %838 = vst [vmem:[%s135 + $0x5e0] sm:$0xff] %v582
        %839 = vst [vmem:[%s135 + $0x5e8] sm:$0xff] %v583
        %840 = vst [vmem:[%s135 + $0x5f0] sm:$0xff] %v584
        %841 = vst [vmem:[%s135 + $0x5f8] sm:$0xff] %v585
        %842 = vst [vmem:[%s135 + $0x600] sm:$0xff] %v586
        %843 = vst [vmem:[%s135 + $0x608] sm:$0xff] %v587
        %844 = vst [vmem:[%s135 + $0x610] sm:$0xff] %v588
        %845 = vst [vmem:[%s135 + $0x618] sm:$0xff] %v589
        %846 = vst [vmem:[%s135 + $0x620] sm:$0xff] %v590
        %847 = vst [vmem:[%s135 + $0x628] sm:$0xff] %v591
        %848 = vst [vmem:[%s135 + $0x630] sm:$0xff] %v592
        %849 = vst [vmem:[%s135 + $0x638] sm:$0xff] %v593
        %850 = vst [vmem:[%s135 + $0x640] sm:$0xff] %v594
        %851 = vst [vmem:[%s135 + $0x648] sm:$0xff] %v595
        %852 = vst [vmem:[%s135 + $0x650] sm:$0xff] %v596
        %853 = vst [vmem:[%s135 + $0x658] sm:$0xff] %v597
        %854 = vst [vmem:[%s135 + $0x660] sm:$0xff] %v598
        %855 = vst [vmem:[%s135 + $0x668] sm:$0xff] %v599
        %856 = vst [vmem:[%s135 + $0x670] sm:$0xff] %v600
        %857 = vst [vmem:[%s135 + $0x678] sm:$0xff] %v601
        %858 = vst [vmem:[%s135 + $0x680] sm:$0xff] %v602
        %859 = vst [vmem:[%s135 + $0x688] sm:$0xff] %v603
        %860 = vst [vmem:[%s135 + $0x690] sm:$0xff] %v604
        %861 = vst [vmem:[%s135 + $0x698] sm:$0xff] %v605
        %862 = vst [vmem:[%s135 + $0x6a0] sm:$0xff] %v606
        %863 = vst [vmem:[%s135 + $0x6a8] sm:$0xff] %v607
        %864 = vst [vmem:[%s135 + $0x6b0] sm:$0xff] %v608
        %865 = vst [vmem:[%s135 + $0x6b8] sm:$0xff] %v609
        %866 = vst [vmem:[%s135 + $0x6c0] sm:$0xff] %v610
        %867 = vst [vmem:[%s135 + $0x6c8] sm:$0xff] %v611
        %868 = vst [vmem:[%s135 + $0x6d0] sm:$0xff] %v612
        %869 = vst [vmem:[%s135 + $0x6d8] sm:$0xff] %v613
        %870 = vst [vmem:[%s135 + $0x6e0] sm:$0xff] %v614
        %871 = vst [vmem:[%s135 + $0x6e8] sm:$0xff] %v615
        %872 = vst [vmem:[%s135 + $0x6f0] sm:$0xff] %v616
        %873 = vst [vmem:[%s135 + $0x6f8] sm:$0xff] %v617
        %874 = vst [vmem:[%s135 + $0x700] sm:$0xff] %v618
        %875 = vst [vmem:[%s135 + $0x708] sm:$0xff] %v619
        %876 = vst [vmem:[%s135 + $0x710] sm:$0xff] %v620
        %877 = vst [vmem:[%s135 + $0x718] sm:$0xff] %v621
        %878 = vst [vmem:[%s135 + $0x720] sm:$0xff] %v622
        %879 = vst [vmem:[%s135 + $0x728] sm:$0xff] %v623
        %880 = vst [vmem:[%s135 + $0x730] sm:$0xff] %v624
        %881 = vst [vmem:[%s135 + $0x738] sm:$0xff] %v625
        %882 = vst [vmem:[%s135 + $0x740] sm:$0xff] %v626
        %883 = vst [vmem:[%s135 + $0x748] sm:$0xff] %v627
        %884 = vst [vmem:[%s135 + $0x750] sm:$0xff] %v628
        %885 = vst [vmem:[%s135 + $0x758] sm:$0xff] %v629
        %886 = vst [vmem:[%s135 + $0x760] sm:$0xff] %v630
        %887 = vst [vmem:[%s135 + $0x768] sm:$0xff] %v631
        %888 = vst [vmem:[%s135 + $0x770] sm:$0xff] %v632
        %889 = vst [vmem:[%s135 + $0x778] sm:$0xff] %v633
        %890 = vst [vmem:[%s135 + $0x780] sm:$0xff] %v634
        %891 = vst [vmem:[%s135 + $0x788] sm:$0xff] %v635
        %892 = vst [vmem:[%s135 + $0x790] sm:$0xff] %v636
        %893 = vst [vmem:[%s135 + $0x798] sm:$0xff] %v637
        %894 = vst [vmem:[%s135 + $0x7a0] sm:$0xff] %v638
        %895 = vst [vmem:[%s135 + $0x7a8] sm:$0xff] %v639
        %896 = vst [vmem:[%s135 + $0x7b0] sm:$0xff] %v640
        %897 = vst [vmem:[%s135 + $0x7b8] sm:$0xff] %v641
        %898 = vst [vmem:[%s135 + $0x7c0] sm:$0xff] %v642
        %899 = vst [vmem:[%s135 + $0x7c8] sm:$0xff] %v643
        %900 = vst [vmem:[%s135 + $0x7d0] sm:$0xff] %v644
        %901 = vst [vmem:[%s135 + $0x7d8] sm:$0xff] %v645
        %902 = vst [vmem:[%s135 + $0x7e0] sm:$0xff] %v646
        %903 = vst [vmem:[%s135 + $0x7e8] sm:$0xff] %v647
        %904 = vst [vmem:[%s135 + $0x7f0] sm:$0xff] %v648
        %905 = vst [vmem:[%s135 + $0x7f8] sm:$0xff] %v649
        %s906 = sand.u32 %s52, 1
        %s907 = scalar_lea.sflag [#allocation4], %s906
        %s908 = sand.u32 %s52, 1
        %s909 = smul.addr %s908, 2048
        %s910 = scalar_lea.vmem [#allocation5], %s909
        // Predicated region
        $region29: #{tpu_custom_call.1} parent=23 // pred_check
          %p911 = pneg %p62
        $region30: #{tpu_custom_call.1} parent=23 // pred_check_branch
          %913 = sbr.rel (%p911) target = $region32
        $region31: #{tpu_custom_call.1} parent=23 // pred_region
          %s914 = smul.u32 32, %s18
          %s916 = ssub.s32 32768, 32768
          %917 = vsyncadd %s907, %s916
          %s918 = smul.addr %s914, 8
          %s919 = smul.addr %s918, 128
          %s920 = scalar_lea.hbm %s1, %s919
          %s921 = sshll.u32 %s910, 4
          %s922 = int_to_ptr.vmem [resolvable:$true] %s921
          %927 = dma.vmem_to_hbm [thread:$0]  %s922, 32768, %s920, %s907, 1024, 1024, 64
        $region32: #{tpu_custom_call.1} parent=23 // pred_fallthru
          _
      $region24: #{tpu_custom_call.1} parent=5 // pred_fallthru
        _
      %p928 = scmp.le.s32.totalorder 2, %s13
      // Predicated region
      $region33: #{tpu_custom_call.1} parent=5 // pred_check
        %p929 = pneg %p928
      $region34: #{tpu_custom_call.1} parent=5 // pred_check_branch
        %931 = sbr.rel (%p929) target = $region36
      $region35: #{tpu_custom_call.1} parent=5 // pred_region
        %s932 = ssub.s32 %s13, 2
        // Predicated region
        $region37: #{tpu_custom_call.1} parent=35 // pred_check
          %p933 = pneg %p68
        $region38: #{tpu_custom_call.1} parent=35 // pred_check_branch
          %935 = sbr.rel (%p933) target = $region40
        $region39: #{tpu_custom_call.1} parent=35 // pred_region
          %s936 = sand.u32 %s53, 1
          %s937 = scalar_lea.sflag [#allocation4], %s936
          %s938 = sand.u32 %s53, 1
          %s939 = smul.addr %s938, 2048
          %s940 = scalar_lea.vmem [#allocation5], %s939
          %941 = dma.done %s937, 32768
        $region40: #{tpu_custom_call.1} parent=35 // pred_fallthru
          _
      $region36: #{tpu_custom_call.1} parent=5 // pred_fallthru
        _
    $region6: #{tpu_custom_call.1} parent=1 // loop_footer
      %s17 = sadd.s32 1, %s13
    $region7: #{tpu_custom_call.1} parent=1 // loop_footer_branch
      %12 = sbr.rel target = $region3
    $region8: #{tpu_custom_call.1} parent=1 // loop_exit
      _
    %942 = vsyncpa [#allocation3], 1
    %s943 = scalar_lea.sflag [#allocation3], 1
    %944 = vsyncpa %s943, 1
    %945 = vsyncpa [#allocation4], 1
    %s946 = scalar_lea.sflag [#allocation4], 1
    %947 = vsyncpa %s946, 1

</llo_original>
